<compile_context>
chip_gen: v6e
topology: v6e:2x2x1
jax: 0.10.0
libtpu: 0.0.40
codegen_flags: <defaults>
</compile_context>

<pallas_src>
import jax
import jax.numpy as jnp
from jax.experimental import pallas as pl
from jax.experimental.pallas import tpu as pltpu


def _round_up(x, m):
    return (x + m - 1) // m * m


def _vmem_capacity_bytes():
    """Physical per-TensorCore VMEM; conservative fallback if unqueryable."""
    try:
        return int(pltpu.get_tpu_info().vmem_capacity_bytes)
    except Exception:
        return 64 << 20  # v7x is the smallest generation (64 MiB)


def _pick_batch_tile(B, per_batch_bytes, target_bytes):
    """Batch-tile rows: multiple of 8 (legal (8,128) block) unless tb == B,
    capped by the per-tile byte budget, and capped at ~B/2 so that B >= 16
    always yields >= 2 grid steps (DMA/compute overlap, v7x core sharding)."""
    cap = max(8, (target_bytes // max(per_batch_bytes, 1)) // 8 * 8)
    if B < 16:
        return B  # too small to split into two legal multiple-of-8 tiles
    half = max(8, (B // 2) // 8 * 8)
    return min(cap, half)


def _measurement_kernel_lane_dense(wt_ref, x_ref, out_ref):
    # diag[b, i] = sum_m Xflat[b, m] * W^T[m, i],  m = j*H + k  (K = H^2)
    diag = jnp.dot(x_ref[...], wt_ref[...], preferred_element_type=jnp.float32)
    m = jnp.max(diag, axis=-1, keepdims=True)
    e = jnp.exp(diag - m)
    out_ref[...] = (e / jnp.sum(e, axis=-1, keepdims=True)).astype(out_ref.dtype)


def _measurement_kernel_general(op_t_ref, x_ref, out_ref):
    # Fallback for large H: S = X_tile @ O^T (one 2-D MXU matmul), then
    # diag[b, i] = sum_j O^T[j, i] * S[b, j, i]  (sublane reduce), then softmax.
    op_t = op_t_ref[...]                                   # (H, H), op_t[j,i] = O[i,j]
    x = x_ref[...]                                         # (tb, H, H)
    tb, h, _ = x.shape
    s = jnp.dot(x.reshape(tb * h, h), op_t,
                preferred_element_type=jnp.float32).reshape(tb, h, h)
    diag = jnp.sum(s * op_t.astype(jnp.float32)[None, :, :], axis=1)  # (tb, H)
    m = jnp.max(diag, axis=-1, keepdims=True)
    e = jnp.exp(diag - m)
    out_ref[...] = (e / jnp.sum(e, axis=-1, keepdims=True)).astype(out_ref.dtype)


def measurement(operator, inputs, *, target_block_bytes=None):
    B, H, H2 = inputs.shape
    assert H == H2 and operator.shape == (H, H)

    itemsize = jnp.dtype(inputs.dtype).itemsize
    vmem_cap = _vmem_capacity_bytes()
    if target_block_bytes is None:
        # Bigger tiles on the 128 MiB generations (v5e/v6e), smaller on v7x.
        target_block_bytes = (20 << 20) if vmem_cap >= (128 << 20) else (8 << 20)
    vmem_ceiling = int(min(0.80 * vmem_cap, 100 << 20))

    if H <= 128:
        # ---- lane-dense path: diag = Xflat @ W^T, K = H^2 ----
        hh = H * H
        per_batch = _round_up(hh, 128) * itemsize           # lane-padded row bytes
        tb = _pick_batch_tile(B, per_batch, target_block_bytes)
        grid = (pl.cdiv(B, tb),)

        # W^T[j*H + k, i] = O[i, j] * O[i, k]; computed once outside the kernel.
        wt = (operator[:, :, None] * operator[:, None, :]).reshape(H, hh).T
        wt = wt.astype(inputs.dtype)                         # bf16 inputs -> bf16 matmul
        x_flat = inputs.reshape(B, hh)

        in_block = _round_up(tb, 8) * per_batch
        wt_block = _round_up(hh, 8) * _round_up(H, 128) * itemsize
        out_block = _round_up(tb, 8) * _round_up(H, 128) * 4
        vmem_est = 2 * in_block + 2 * wt_block + 2 * out_block + (2 << 20)
        vmem_limit = int(min(max(vmem_est, 16 << 20), vmem_ceiling))

        return pl.pallas_call(
            _measurement_kernel_lane_dense,
            out_shape=jax.ShapeDtypeStruct((B, H), jnp.float32),
            grid=grid,
            in_specs=[
                pl.BlockSpec((hh, H), lambda b: (0, 0)),     # W^T, fetched once
                pl.BlockSpec((tb, hh), lambda b: (b, 0)),    # lane-dense batch tile
            ],
            out_specs=pl.BlockSpec((tb, H), lambda b: (b, 0)),
            compiler_params=pltpu.CompilerParams(
                dimension_semantics=("parallel",),
                vmem_limit_bytes=vmem_limit,
            ),
        )(wt, x_flat)

    # ---- large-H fallback: X @ O^T + weighted sublane reduce ----
    # TODO(synk): for very large H (single (tb,H,H) block too big) tile over H too.
    op_t = operator.T.astype(inputs.dtype)
    pad_lane = _round_up(H, 128)
    pad_sub = _round_up(H, 8)
    in_per_batch = pad_sub * pad_lane * itemsize
    s_per_batch = pad_sub * pad_lane * 4                     # f32 intermediate
    tb = _pick_batch_tile(B, 2 * in_per_batch + s_per_batch, target_block_bytes)
    grid = (pl.cdiv(B, tb),)

    op_block = pad_sub * pad_lane * itemsize
    out_block = _round_up(tb, 8) * pad_lane * 4
    vmem_est = (2 * tb * in_per_batch + tb * s_per_batch
                + 2 * op_block + 2 * out_block + (2 << 20))
    vmem_limit = int(min(max(vmem_est, 16 << 20), vmem_ceiling))

    return pl.pallas_call(
        _measurement_kernel_general,
        out_shape=jax.ShapeDtypeStruct((B, H), jnp.float32),
        grid=grid,
        in_specs=[
            pl.BlockSpec((H, H), lambda b: (0, 0)),          # O^T, fetched once
            pl.BlockSpec((tb, H, H), lambda b: (b, 0, 0)),   # batch tile
        ],
        out_specs=pl.BlockSpec((tb, H), lambda b: (b, 0)),
        compiler_params=pltpu.CompilerParams(
            dimension_semantics=("parallel",),
            vmem_limit_bytes=vmem_limit,
        ),
    )(op_t, inputs)


def _reference(operator, inputs):
    mm = jnp.einsum("ij,bjk->bik", operator, inputs)
    mm = jnp.einsum("bik,jk->bij", mm, operator)             # mm @ operator.T
    diag = jnp.diagonal(mm, axis1=1, axis2=2)
    return jax.nn.softmax(diag, axis=1)


if __name__ == "__main__":
    key = jax.random.PRNGKey(0)
    k_op, k_x1, k_x2 = jax.random.split(key, 3)

    H = 32
    # Deterministic orthogonal init (same semantics as nn.init.orthogonal_):
    # QR of a Gaussian matrix, sign-corrected so R has a positive diagonal.
    a = jax.random.normal(k_op, (H, H), dtype=jnp.float32)
    q, r = jnp.linalg.qr(a)
    operator = q * jnp.sign(jnp.diagonal(r))[None, :]

    # Canonical small shape: batch=2, hidden=32 (single-tile path).
    x_small = jax.random.normal(k_x1, (2, H, H), dtype=jnp.float32)
    out_small = jax.block_until_ready(measurement(operator, x_small))
    ref_small = _reference(operator, x_small)
    assert out_small.shape == (2, H)
    assert jnp.allclose(out_small, ref_small, atol=1e-5, rtol=1e-4), \
        "mismatch vs reference (small batch)"

    # Multi-tile + ragged-last-block path (B=20 -> tiles of 8 rows, grid of 3).
    x_big = jax.random.normal(k_x2, (20, H, H), dtype=jnp.float32)
    out_big = jax.block_until_ready(measurement(operator, x_big))
    ref_big = _reference(operator, x_big)
    assert out_big.shape == (20, H)
    assert jnp.allclose(out_big, ref_big, atol=1e-5, rtol=1e-4), \
        "mismatch vs reference (ragged batch)"

    print("KERNEL_OK")
</pallas_src>

<mosaic_0001>
module attributes {stable_mosaic.version = 11 : i64} {
  func.func @_measurement_kernel_lane_dense(%arg0: i32, %arg1: memref<1024x32xf32, #tpu.memory_space<vmem>>, %arg2: memref<2x1024xf32, #tpu.memory_space<vmem>>, %arg3: memref<2x32xf32, #tpu.memory_space<vmem>>) attributes {dimension_semantics = [#tpu.dimension_semantics<parallel>], iteration_bounds = array<i64: 1>, scalar_prefetch = 0 : i64, scratch_operands = 0 : i64, tpu.core_type = #tpu.core_type<tc>, window_params = [{pipeline_mode = #tpu.pipeline_mode<synchronous>, transform_indices = @transform_0, window_bounds = array<i64: 1024, 32>}, {transform_indices = @transform_1, window_bounds = array<i64: 2, 1024>}, {transform_indices = @transform_2, window_bounds = array<i64: 2, 32>}]} {
    %c0 = arith.constant 0 : index
    %c0_0 = arith.constant 0 : index
    %0 = vector.load %arg2[%c0, %c0_0] : memref<2x1024xf32, #tpu.memory_space<vmem>>, vector<2x1024xf32>
    %c0_1 = arith.constant 0 : index
    %c0_2 = arith.constant 0 : index
    %1 = vector.load %arg1[%c0_1, %c0_2] : memref<1024x32xf32, #tpu.memory_space<vmem>>, vector<1024x32xf32>
    %cst = arith.constant dense<0.000000e+00> : vector<2x32xf32>
    %2 = tpu.matmul %0, %1, %cst {dimension_numbers = #tpu.dot_dimension_numbers<[1], [0], [0], [1], [0, 0, 1, 1], [], []>} : vector<2x1024xf32>, vector<1024x32xf32>, vector<2x32xf32> -> vector<2x32xf32>
    %cst_3 = arith.constant dense<0xFF800000> : vector<2xf32>
    %3 = vector.multi_reduction <maximumf>, %2, %cst_3 [1] : vector<2x32xf32> to vector<2xf32>
    %4 = vector.shape_cast %3 : vector<2xf32> to vector<2x1xf32>
    %5 = vector.broadcast %4 : vector<2x1xf32> to vector<2x32xf32>
    %6 = arith.subf %2, %5 : vector<2x32xf32>
    %7 = math.exp %6 : vector<2x32xf32>
    %cst_4 = arith.constant dense<0.000000e+00> : vector<2xf32>
    %8 = vector.multi_reduction <add>, %7, %cst_4 [1] : vector<2x32xf32> to vector<2xf32>
    %9 = vector.shape_cast %8 : vector<2xf32> to vector<2x1xf32>
    %10 = vector.broadcast %9 : vector<2x1xf32> to vector<2x32xf32>
    %11 = arith.divf %7, %10 : vector<2x32xf32>
    %c0_5 = arith.constant 0 : index
    %c0_6 = arith.constant 0 : index
    %12 = vector.load %arg3[%c0_5, %c0_6] : memref<2x32xf32, #tpu.memory_space<vmem>>, vector<2x32xf32>
    tpu.vector_store %arg3[%c0_5, %c0_6], %11 {strides = array<i32>} : memref<2x32xf32, #tpu.memory_space<vmem>>, vector<2x32xf32>,
    return
  }
  func.func @transform_0(%arg0: i32) -> (i32, i32) {
    %c0_i32 = arith.constant 0 : i32
    %c0_i32_0 = arith.constant 0 : i32
    %c0_i32_1 = arith.constant 0 : i32
    return %c0_i32, %c0_i32_0 : i32, i32
  }
  func.func @transform_1(%arg0: i32) -> (i32, i32) {
    %c0_i32 = arith.constant 0 : i32
    %c0_i32_0 = arith.constant 0 : i32
    return %arg0, %c0_i32 : i32, i32
  }
  func.func @transform_2(%arg0: i32) -> (i32, i32) {
    %c0_i32 = arith.constant 0 : i32
    %c0_i32_0 = arith.constant 0 : i32
    return %arg0, %c0_i32 : i32, i32
  }
}

</mosaic_0001>

<llo_original>
// kernel: tpu_custom_call.1
$region0: #{tpu_custom_call.1}
  #allocation0 [shape = 'u32[]', space=smem, size = 0x4, offset = 0x4, fixed_abs, tag = 'smem constant byte address 0x4 - core index']
  #allocation1 [shape = 'u32[144,128]{1,0:T(1,128)}', space=vmem, size = 0x12000, scoped, tag = 'internal scratch']
  %s0 = inlined_call_operand.vmem [shape: f32[1024,32], index: 0, kind: input, shape index: {}]
  %s1 = inlined_call_operand.vmem [shape: f32[2,1024], index: 1, kind: input, shape index: {}]
  %s2 = inlined_call_operand.hbm [shape: f32[2,32], index: 2, kind: output, shape index: {}]
  %s3 = sld [smem:[#allocation0]]
  $region18: #{tpu_custom_call.1} parent=0
    _
  %s5 = ssub.s32 1, %s3
  %s6 = scalar_select 0, %s5, %s3
  $region1: #{tpu_custom_call.1} parent=0
    #allocation2 [shape = 'u8[1024]{0}', space=vmem, size = 0x400, scoped, tag = 'output window, operand 0, single buffered']
    #allocation3 [shape = 's32[1]{0}', space=sflag, size = 0x4, scoped, tag = 'scoped memory for tpu_custom_call.1']
    %7 = vsyncpa [#allocation3], 0
    // Predicated region
    $region2: #{tpu_custom_call.1} parent=1 // pred_check
      _
    $region3: #{tpu_custom_call.1} parent=1 // pred_check_branch
      %9 = sbr.rel (0) target = $region5
    $region4: #{tpu_custom_call.1} parent=1 // pred_region
      _
    $region5: #{tpu_custom_call.1} parent=1 // pred_fallthru
      _
    // Predicated region
    $region6: #{tpu_custom_call.1} parent=1 // pred_check
      _
    $region7: #{tpu_custom_call.1} parent=1 // pred_check_branch
      %11 = sbr.rel (0) target = $region9
    $region8: #{tpu_custom_call.1} parent=1 // pred_region
      _
    $region9: #{tpu_custom_call.1} parent=1 // pred_fallthru
      _
    %v12 = vld [vmem:[%s1] sm:$0xff]
    %v13 = vld [vmem:[%s1 + $0x8] sm:$0xff]
    %v14 = vld [vmem:[%s0] sm:$0xff]
    %v15 = vld [vmem:[%s0 + $0x8] sm:$0xff]
    %v16 = vld [vmem:[%s0 + $0x10] sm:$0xff]
    %v17 = vld [vmem:[%s0 + $0x18] sm:$0xff]
    %v18 = vld [vmem:[%s0 + $0x20] sm:$0xff]
    %v19 = vld [vmem:[%s0 + $0x28] sm:$0xff]
    %v20 = vld [vmem:[%s0 + $0x30] sm:$0xff]
    %v21 = vld [vmem:[%s0 + $0x38] sm:$0xff]
    %v22 = vld [vmem:[%s0 + $0x40] sm:$0xff]
    %v23 = vld [vmem:[%s0 + $0x48] sm:$0xff]
    %v24 = vld [vmem:[%s0 + $0x50] sm:$0xff]
    %v25 = vld [vmem:[%s0 + $0x58] sm:$0xff]
    %v26 = vld [vmem:[%s0 + $0x60] sm:$0xff]
    %v27 = vld [vmem:[%s0 + $0x68] sm:$0xff]
    %v28 = vld [vmem:[%s0 + $0x70] sm:$0xff]
    %v29 = vld [vmem:[%s0 + $0x78] sm:$0xff]
    %v30 = vld [vmem:[%s0 + $0x80] sm:$0xff]
    %v31 = vld [vmem:[%s0 + $0x88] sm:$0xff]
    %v32 = vld [vmem:[%s0 + $0x90] sm:$0xff]
    %v33 = vld [vmem:[%s0 + $0x98] sm:$0xff]
    %v34 = vld [vmem:[%s0 + $0xa0] sm:$0xff]
    %v35 = vld [vmem:[%s0 + $0xa8] sm:$0xff]
    %v36 = vld [vmem:[%s0 + $0xb0] sm:$0xff]
    %v37 = vld [vmem:[%s0 + $0xb8] sm:$0xff]
    %v38 = vld [vmem:[%s0 + $0xc0] sm:$0xff]
    %v39 = vld [vmem:[%s0 + $0xc8] sm:$0xff]
    %v40 = vld [vmem:[%s0 + $0xd0] sm:$0xff]
    %v41 = vld [vmem:[%s0 + $0xd8] sm:$0xff]
    %v42 = vld [vmem:[%s0 + $0xe0] sm:$0xff]
    %v43 = vld [vmem:[%s0 + $0xe8] sm:$0xff]
    %v44 = vld [vmem:[%s0 + $0xf0] sm:$0xff]
    %v45 = vld [vmem:[%s0 + $0xf8] sm:$0xff]
    %v46 = vld [vmem:[%s0 + $0x100] sm:$0xff]
    %v47 = vld [vmem:[%s0 + $0x108] sm:$0xff]
    %v48 = vld [vmem:[%s0 + $0x110] sm:$0xff]
    %v49 = vld [vmem:[%s0 + $0x118] sm:$0xff]
    %v50 = vld [vmem:[%s0 + $0x120] sm:$0xff]
    %v51 = vld [vmem:[%s0 + $0x128] sm:$0xff]
    %v52 = vld [vmem:[%s0 + $0x130] sm:$0xff]
    %v53 = vld [vmem:[%s0 + $0x138] sm:$0xff]
    %v54 = vld [vmem:[%s0 + $0x140] sm:$0xff]
    %v55 = vld [vmem:[%s0 + $0x148] sm:$0xff]
    %v56 = vld [vmem:[%s0 + $0x150] sm:$0xff]
    %v57 = vld [vmem:[%s0 + $0x158] sm:$0xff]
    %v58 = vld [vmem:[%s0 + $0x160] sm:$0xff]
    %v59 = vld [vmem:[%s0 + $0x168] sm:$0xff]
    %v60 = vld [vmem:[%s0 + $0x170] sm:$0xff]
    %v61 = vld [vmem:[%s0 + $0x178] sm:$0xff]
    %v62 = vld [vmem:[%s0 + $0x180] sm:$0xff]
    %v63 = vld [vmem:[%s0 + $0x188] sm:$0xff]
    %v64 = vld [vmem:[%s0 + $0x190] sm:$0xff]
    %v65 = vld [vmem:[%s0 + $0x198] sm:$0xff]
    %v66 = vld [vmem:[%s0 + $0x1a0] sm:$0xff]
    %v67 = vld [vmem:[%s0 + $0x1a8] sm:$0xff]
    %v68 = vld [vmem:[%s0 + $0x1b0] sm:$0xff]
    %v69 = vld [vmem:[%s0 + $0x1b8] sm:$0xff]
    %v70 = vld [vmem:[%s0 + $0x1c0] sm:$0xff]
    %v71 = vld [vmem:[%s0 + $0x1c8] sm:$0xff]
    %v72 = vld [vmem:[%s0 + $0x1d0] sm:$0xff]
    %v73 = vld [vmem:[%s0 + $0x1d8] sm:$0xff]
    %v74 = vld [vmem:[%s0 + $0x1e0] sm:$0xff]
    %v75 = vld [vmem:[%s0 + $0x1e8] sm:$0xff]
    %v76 = vld [vmem:[%s0 + $0x1f0] sm:$0xff]
    %v77 = vld [vmem:[%s0 + $0x1f8] sm:$0xff]
    %v78 = vld [vmem:[%s0 + $0x200] sm:$0xff]
    %v79 = vld [vmem:[%s0 + $0x208] sm:$0xff]
    %v80 = vld [vmem:[%s0 + $0x210] sm:$0xff]
    %v81 = vld [vmem:[%s0 + $0x218] sm:$0xff]
    %v82 = vld [vmem:[%s0 + $0x220] sm:$0xff]
    %v83 = vld [vmem:[%s0 + $0x228] sm:$0xff]
    %v84 = vld [vmem:[%s0 + $0x230] sm:$0xff]
    %v85 = vld [vmem:[%s0 + $0x238] sm:$0xff]
    %v86 = vld [vmem:[%s0 + $0x240] sm:$0xff]
    %v87 = vld [vmem:[%s0 + $0x248] sm:$0xff]
    %v88 = vld [vmem:[%s0 + $0x250] sm:$0xff]
    %v89 = vld [vmem:[%s0 + $0x258] sm:$0xff]
    %v90 = vld [vmem:[%s0 + $0x260] sm:$0xff]
    %v91 = vld [vmem:[%s0 + $0x268] sm:$0xff]
    %v92 = vld [vmem:[%s0 + $0x270] sm:$0xff]
    %v93 = vld [vmem:[%s0 + $0x278] sm:$0xff]
    %v94 = vld [vmem:[%s0 + $0x280] sm:$0xff]
    %v95 = vld [vmem:[%s0 + $0x288] sm:$0xff]
    %v96 = vld [vmem:[%s0 + $0x290] sm:$0xff]
    %v97 = vld [vmem:[%s0 + $0x298] sm:$0xff]
    %v98 = vld [vmem:[%s0 + $0x2a0] sm:$0xff]
    %v99 = vld [vmem:[%s0 + $0x2a8] sm:$0xff]
    %v100 = vld [vmem:[%s0 + $0x2b0] sm:$0xff]
    %v101 = vld [vmem:[%s0 + $0x2b8] sm:$0xff]
    %v102 = vld [vmem:[%s0 + $0x2c0] sm:$0xff]
    %v103 = vld [vmem:[%s0 + $0x2c8] sm:$0xff]
    %v104 = vld [vmem:[%s0 + $0x2d0] sm:$0xff]
    %v105 = vld [vmem:[%s0 + $0x2d8] sm:$0xff]
    %v106 = vld [vmem:[%s0 + $0x2e0] sm:$0xff]
    %v107 = vld [vmem:[%s0 + $0x2e8] sm:$0xff]
    %v108 = vld [vmem:[%s0 + $0x2f0] sm:$0xff]
    %v109 = vld [vmem:[%s0 + $0x2f8] sm:$0xff]
    %v110 = vld [vmem:[%s0 + $0x300] sm:$0xff]
    %v111 = vld [vmem:[%s0 + $0x308] sm:$0xff]
    %v112 = vld [vmem:[%s0 + $0x310] sm:$0xff]
    %v113 = vld [vmem:[%s0 + $0x318] sm:$0xff]
    %v114 = vld [vmem:[%s0 + $0x320] sm:$0xff]
    %v115 = vld [vmem:[%s0 + $0x328] sm:$0xff]
    %v116 = vld [vmem:[%s0 + $0x330] sm:$0xff]
    %v117 = vld [vmem:[%s0 + $0x338] sm:$0xff]
    %v118 = vld [vmem:[%s0 + $0x340] sm:$0xff]
    %v119 = vld [vmem:[%s0 + $0x348] sm:$0xff]
    %v120 = vld [vmem:[%s0 + $0x350] sm:$0xff]
    %v121 = vld [vmem:[%s0 + $0x358] sm:$0xff]
    %v122 = vld [vmem:[%s0 + $0x360] sm:$0xff]
    %v123 = vld [vmem:[%s0 + $0x368] sm:$0xff]
    %v124 = vld [vmem:[%s0 + $0x370] sm:$0xff]
    %v125 = vld [vmem:[%s0 + $0x378] sm:$0xff]
    %v126 = vld [vmem:[%s0 + $0x380] sm:$0xff]
    %v127 = vld [vmem:[%s0 + $0x388] sm:$0xff]
    %v128 = vld [vmem:[%s0 + $0x390] sm:$0xff]
    %v129 = vld [vmem:[%s0 + $0x398] sm:$0xff]
    %v130 = vld [vmem:[%s0 + $0x3a0] sm:$0xff]
    %v131 = vld [vmem:[%s0 + $0x3a8] sm:$0xff]
    %v132 = vld [vmem:[%s0 + $0x3b0] sm:$0xff]
    %v133 = vld [vmem:[%s0 + $0x3b8] sm:$0xff]
    %v134 = vld [vmem:[%s0 + $0x3c0] sm:$0xff]
    %v135 = vld [vmem:[%s0 + $0x3c8] sm:$0xff]
    %v136 = vld [vmem:[%s0 + $0x3d0] sm:$0xff]
    %v137 = vld [vmem:[%s0 + $0x3d8] sm:$0xff]
    %v138 = vld [vmem:[%s0 + $0x3e0] sm:$0xff]
    %v139 = vld [vmem:[%s0 + $0x3e8] sm:$0xff]
    %v140 = vld [vmem:[%s0 + $0x3f0] sm:$0xff]
    %v141 = vld [vmem:[%s0 + $0x3f8] sm:$0xff]
    %v144 = vcombine.high %v12, %v12
    %v146 = vunpack.c.l.s4 1983009808
    %v147 = vunpack.c.0.s8 %v146
    %v148 = vlaneseq
    %v149 = vshrl.u32 %v148, 7
    %v150 = vsub.s32 %v147, %v149
    %v151 = vrot.slane %v12, %v150
    %v153 = vunpack.c.l.s4 1983009808
    %v154 = vunpack.c.0.s8 %v153
    %v155 = vlaneseq
    %v156 = vshrl.u32 %v155, 7
    %v157 = vsub.s32 %v154, %v156
    %v158 = vrot.slane %v144, %v157
    %v159 = vcombine.high %v151, %v151
    %v160 = vcombine.high %v158, %v158
    %v161 = vcombine.high %v13, %v13
    %v163 = vunpack.c.l.s4 1983009808
    %v164 = vunpack.c.0.s8 %v163
    %v165 = vlaneseq
    %v166 = vshrl.u32 %v165, 7
    %v167 = vsub.s32 %v164, %v166
    %v168 = vrot.slane %v13, %v167
    %v170 = vunpack.c.l.s4 1983009808
    %v171 = vunpack.c.0.s8 %v170
    %v172 = vlaneseq
    %v173 = vshrl.u32 %v172, 7
    %v174 = vsub.s32 %v171, %v173
    %v175 = vrot.slane %v161, %v174
    %v176 = vcombine.high %v168, %v168
    %v177 = vcombine.high %v175, %v175
    %186 = vmatprep.subr.mxu0 0.0
    %187 = vmatpush1.msra.mxu0 %v29
    %188 = vmatprep.subr.mxu0 0.0
    %189 = vmatpush1.msra.mxu0 %v28
    %190 = vmatprep.subr.mxu0 0.0
    %191 = vmatpush1.msra.mxu0 %v27
    %192 = vmatprep.subr.mxu0 0.0
    %193 = vmatpush1.msra.mxu0 %v26
    %194 = vmatprep.subr.mxu0 0.0
    %195 = vmatpush1.msra.mxu0 %v25
    %196 = vmatprep.subr.mxu0 0.0
    %197 = vmatpush1.msra.mxu0 %v24
    %198 = vmatprep.subr.mxu0 0.0
    %199 = vmatpush1.msra.mxu0 %v23
    %200 = vmatprep.subr.mxu0 0.0
    %201 = vmatpush1.msra.mxu0 %v22
    %202 = vmatprep.subr.mxu0 0.0
    %203 = vmatpush1.msra.mxu0 %v21
    %204 = vmatprep.subr.mxu0 0.0
    %205 = vmatpush1.msra.mxu0 %v20
    %206 = vmatprep.subr.mxu0 0.0
    %207 = vmatpush1.msra.mxu0 %v19
    %208 = vmatprep.subr.mxu0 0.0
    %209 = vmatpush1.msra.mxu0 %v18
    %210 = vmatprep.subr.mxu0 0.0
    %211 = vmatpush1.msra.mxu0 %v17
    %212 = vmatprep.subr.mxu0 0.0
    %213 = vmatpush1.msra.mxu0 %v16
    %214 = vmatprep.subr.mxu0 0.0
    %215 = vmatpush1.msra.mxu0 %v15
    %216 = vmatprep.subr.mxu0 0.0
    %217 = vmatpush1.msra.mxu0 %v14
    %218 = vmatprep.subr.mxu0 0.0
    %219 = vmatpush2.msra.mxu0 %v45
    %220 = vmatprep.subr.mxu0 0.0
    %221 = vmatpush2.msra.mxu0 %v44
    %222 = vmatprep.subr.mxu0 0.0
    %223 = vmatpush2.msra.mxu0 %v43
    %224 = vmatprep.subr.mxu0 0.0
    %225 = vmatpush2.msra.mxu0 %v42
    %226 = vmatprep.subr.mxu0 0.0
    %227 = vmatpush2.msra.mxu0 %v41
    %228 = vmatprep.subr.mxu0 0.0
    %229 = vmatpush2.msra.mxu0 %v40
    %230 = vmatprep.subr.mxu0 0.0
    %231 = vmatpush2.msra.mxu0 %v39
    %232 = vmatprep.subr.mxu0 0.0
    %233 = vmatpush2.msra.mxu0 %v38
    %234 = vmatprep.subr.mxu0 0.0
    %235 = vmatpush2.msra.mxu0 %v37
    %236 = vmatprep.subr.mxu0 0.0
    %237 = vmatpush2.msra.mxu0 %v36
    %238 = vmatprep.subr.mxu0 0.0
    %239 = vmatpush2.msra.mxu0 %v35
    %240 = vmatprep.subr.mxu0 0.0
    %241 = vmatpush2.msra.mxu0 %v34
    %242 = vmatprep.subr.mxu0 0.0
    %243 = vmatpush2.msra.mxu0 %v33
    %244 = vmatprep.subr.mxu0 0.0
    %245 = vmatpush2.msra.mxu0 %v32
    %246 = vmatprep.subr.mxu0 0.0
    %247 = vmatpush2.msra.mxu0 %v31
    %248 = vmatprep.subr.mxu0 0.0
    %249 = vmatpush2.msra.mxu0 %v30
    %250 = vmatprep.mubr.f32.mxu0 %v159
    %251 = vmatmul.mubr.f32.gmra.mxu0 %v151
    %v252 = vpop.f32.mrf.mxu0
    %v253 = vadd.f32 0.0, %v252
    %v254 = vpop.f32.mrf.mxu0
    %255 = vdwg.mxu0
    %256 = vmatprep.subr.mxu0 0.0
    %257 = vmatpush1.msra.mxu0 %v61
    %258 = vmatprep.subr.mxu0 0.0
    %259 = vmatpush1.msra.mxu0 %v60
    %260 = vmatprep.subr.mxu0 0.0
    %261 = vmatpush1.msra.mxu0 %v59
    %262 = vmatprep.subr.mxu0 0.0
    %263 = vmatpush1.msra.mxu0 %v58
    %264 = vmatprep.subr.mxu0 0.0
    %265 = vmatpush1.msra.mxu0 %v57
    %266 = vmatprep.subr.mxu0 0.0
    %267 = vmatpush1.msra.mxu0 %v56
    %268 = vmatprep.subr.mxu0 0.0
    %269 = vmatpush1.msra.mxu0 %v55
    %270 = vmatprep.subr.mxu0 0.0
    %271 = vmatpush1.msra.mxu0 %v54
    %272 = vmatprep.subr.mxu0 0.0
    %273 = vmatpush1.msra.mxu0 %v53
    %274 = vmatprep.subr.mxu0 0.0
    %275 = vmatpush1.msra.mxu0 %v52
    %276 = vmatprep.subr.mxu0 0.0
    %277 = vmatpush1.msra.mxu0 %v51
    %278 = vmatprep.subr.mxu0 0.0
    %279 = vmatpush1.msra.mxu0 %v50
    %280 = vmatprep.subr.mxu0 0.0
    %281 = vmatpush1.msra.mxu0 %v49
    %282 = vmatprep.subr.mxu0 0.0
    %283 = vmatpush1.msra.mxu0 %v48
    %284 = vmatprep.subr.mxu0 0.0
    %285 = vmatpush1.msra.mxu0 %v47
    %286 = vmatprep.subr.mxu0 0.0
    %287 = vmatpush1.msra.mxu0 %v46
    %288 = vmatprep.subr.mxu0 0.0
    %289 = vmatpush2.msra.mxu0 %v77
    %290 = vmatprep.subr.mxu0 0.0
    %291 = vmatpush2.msra.mxu0 %v76
    %292 = vmatprep.subr.mxu0 0.0
    %293 = vmatpush2.msra.mxu0 %v75
    %294 = vmatprep.subr.mxu0 0.0
    %295 = vmatpush2.msra.mxu0 %v74
    %296 = vmatprep.subr.mxu0 0.0
    %297 = vmatpush2.msra.mxu0 %v73
    %298 = vmatprep.subr.mxu0 0.0
    %299 = vmatpush2.msra.mxu0 %v72
    %300 = vmatprep.subr.mxu0 0.0
    %301 = vmatpush2.msra.mxu0 %v71
    %302 = vmatprep.subr.mxu0 0.0
    %303 = vmatpush2.msra.mxu0 %v70
    %304 = vmatprep.subr.mxu0 0.0
    %305 = vmatpush2.msra.mxu0 %v69
    %306 = vmatprep.subr.mxu0 0.0
    %307 = vmatpush2.msra.mxu0 %v68
    %308 = vmatprep.subr.mxu0 0.0
    %309 = vmatpush2.msra.mxu0 %v67
    %310 = vmatprep.subr.mxu0 0.0
    %311 = vmatpush2.msra.mxu0 %v66
    %312 = vmatprep.subr.mxu0 0.0
    %313 = vmatpush2.msra.mxu0 %v65
    %314 = vmatprep.subr.mxu0 0.0
    %315 = vmatpush2.msra.mxu0 %v64
    %316 = vmatprep.subr.mxu0 0.0
    %317 = vmatpush2.msra.mxu0 %v63
    %318 = vmatprep.subr.mxu0 0.0
    %319 = vmatpush2.msra.mxu0 %v62
    %320 = vmatprep.mubr.f32.mxu0 %v160
    %321 = vmatmul.mubr.f32.gmra.mxu0 %v158
    %v322 = vpop.f32.mrf.mxu0
    %v323 = vadd.f32 %v253, %v322
    %v324 = vpop.f32.mrf.mxu0
    %325 = vdwg.mxu0
    %326 = vmatprep.subr.mxu0 0.0
    %327 = vmatpush1.msra.mxu0 %v93
    %328 = vmatprep.subr.mxu0 0.0
    %329 = vmatpush1.msra.mxu0 %v92
    %330 = vmatprep.subr.mxu0 0.0
    %331 = vmatpush1.msra.mxu0 %v91
    %332 = vmatprep.subr.mxu0 0.0
    %333 = vmatpush1.msra.mxu0 %v90
    %334 = vmatprep.subr.mxu0 0.0
    %335 = vmatpush1.msra.mxu0 %v89
    %336 = vmatprep.subr.mxu0 0.0
    %337 = vmatpush1.msra.mxu0 %v88
    %338 = vmatprep.subr.mxu0 0.0
    %339 = vmatpush1.msra.mxu0 %v87
    %340 = vmatprep.subr.mxu0 0.0
    %341 = vmatpush1.msra.mxu0 %v86
    %342 = vmatprep.subr.mxu0 0.0
    %343 = vmatpush1.msra.mxu0 %v85
    %344 = vmatprep.subr.mxu0 0.0
    %345 = vmatpush1.msra.mxu0 %v84
    %346 = vmatprep.subr.mxu0 0.0
    %347 = vmatpush1.msra.mxu0 %v83
    %348 = vmatprep.subr.mxu0 0.0
    %349 = vmatpush1.msra.mxu0 %v82
    %350 = vmatprep.subr.mxu0 0.0
    %351 = vmatpush1.msra.mxu0 %v81
    %352 = vmatprep.subr.mxu0 0.0
    %353 = vmatpush1.msra.mxu0 %v80
    %354 = vmatprep.subr.mxu0 0.0
    %355 = vmatpush1.msra.mxu0 %v79
    %356 = vmatprep.subr.mxu0 0.0
    %357 = vmatpush1.msra.mxu0 %v78
    %358 = vmatprep.subr.mxu0 0.0
    %359 = vmatpush2.msra.mxu0 %v109
    %360 = vmatprep.subr.mxu0 0.0
    %361 = vmatpush2.msra.mxu0 %v108
    %362 = vmatprep.subr.mxu0 0.0
    %363 = vmatpush2.msra.mxu0 %v107
    %364 = vmatprep.subr.mxu0 0.0
    %365 = vmatpush2.msra.mxu0 %v106
    %366 = vmatprep.subr.mxu0 0.0
    %367 = vmatpush2.msra.mxu0 %v105
    %368 = vmatprep.subr.mxu0 0.0
    %369 = vmatpush2.msra.mxu0 %v104
    %370 = vmatprep.subr.mxu0 0.0
    %371 = vmatpush2.msra.mxu0 %v103
    %372 = vmatprep.subr.mxu0 0.0
    %373 = vmatpush2.msra.mxu0 %v102
    %374 = vmatprep.subr.mxu0 0.0
    %375 = vmatpush2.msra.mxu0 %v101
    %376 = vmatprep.subr.mxu0 0.0
    %377 = vmatpush2.msra.mxu0 %v100
    %378 = vmatprep.subr.mxu0 0.0
    %379 = vmatpush2.msra.mxu0 %v99
    %380 = vmatprep.subr.mxu0 0.0
    %381 = vmatpush2.msra.mxu0 %v98
    %382 = vmatprep.subr.mxu0 0.0
    %383 = vmatpush2.msra.mxu0 %v97
    %384 = vmatprep.subr.mxu0 0.0
    %385 = vmatpush2.msra.mxu0 %v96
    %386 = vmatprep.subr.mxu0 0.0
    %387 = vmatpush2.msra.mxu0 %v95
    %388 = vmatprep.subr.mxu0 0.0
    %389 = vmatpush2.msra.mxu0 %v94
    %390 = vmatprep.mubr.f32.mxu0 %v176
    %391 = vmatmul.mubr.f32.gmra.mxu0 %v168
    %v392 = vpop.f32.mrf.mxu0
    %v393 = vadd.f32 %v323, %v392
    %v394 = vpop.f32.mrf.mxu0
    %395 = vdwg.mxu0
    %396 = vmatprep.subr.mxu0 0.0
    %397 = vmatpush1.msra.mxu0 %v125
    %398 = vmatprep.subr.mxu0 0.0
    %399 = vmatpush1.msra.mxu0 %v124
    %400 = vmatprep.subr.mxu0 0.0
    %401 = vmatpush1.msra.mxu0 %v123
    %402 = vmatprep.subr.mxu0 0.0
    %403 = vmatpush1.msra.mxu0 %v122
    %404 = vmatprep.subr.mxu0 0.0
    %405 = vmatpush1.msra.mxu0 %v121
    %406 = vmatprep.subr.mxu0 0.0
    %407 = vmatpush1.msra.mxu0 %v120
    %408 = vmatprep.subr.mxu0 0.0
    %409 = vmatpush1.msra.mxu0 %v119
    %410 = vmatprep.subr.mxu0 0.0
    %411 = vmatpush1.msra.mxu0 %v118
    %412 = vmatprep.subr.mxu0 0.0
    %413 = vmatpush1.msra.mxu0 %v117
    %414 = vmatprep.subr.mxu0 0.0
    %415 = vmatpush1.msra.mxu0 %v116
    %416 = vmatprep.subr.mxu0 0.0
    %417 = vmatpush1.msra.mxu0 %v115
    %418 = vmatprep.subr.mxu0 0.0
    %419 = vmatpush1.msra.mxu0 %v114
    %420 = vmatprep.subr.mxu0 0.0
    %421 = vmatpush1.msra.mxu0 %v113
    %422 = vmatprep.subr.mxu0 0.0
    %423 = vmatpush1.msra.mxu0 %v112
    %424 = vmatprep.subr.mxu0 0.0
    %425 = vmatpush1.msra.mxu0 %v111
    %426 = vmatprep.subr.mxu0 0.0
    %427 = vmatpush1.msra.mxu0 %v110
    %428 = vmatprep.subr.mxu0 0.0
    %429 = vmatpush2.msra.mxu0 %v141
    %430 = vmatprep.subr.mxu0 0.0
    %431 = vmatpush2.msra.mxu0 %v140
    %432 = vmatprep.subr.mxu0 0.0
    %433 = vmatpush2.msra.mxu0 %v139
    %434 = vmatprep.subr.mxu0 0.0
    %435 = vmatpush2.msra.mxu0 %v138
    %436 = vmatprep.subr.mxu0 0.0
    %437 = vmatpush2.msra.mxu0 %v137
    %438 = vmatprep.subr.mxu0 0.0
    %439 = vmatpush2.msra.mxu0 %v136
    %440 = vmatprep.subr.mxu0 0.0
    %441 = vmatpush2.msra.mxu0 %v135
    %442 = vmatprep.subr.mxu0 0.0
    %443 = vmatpush2.msra.mxu0 %v134
    %444 = vmatprep.subr.mxu0 0.0
    %445 = vmatpush2.msra.mxu0 %v133
    %446 = vmatprep.subr.mxu0 0.0
    %447 = vmatpush2.msra.mxu0 %v132
    %448 = vmatprep.subr.mxu0 0.0
    %449 = vmatpush2.msra.mxu0 %v131
    %450 = vmatprep.subr.mxu0 0.0
    %451 = vmatpush2.msra.mxu0 %v130
    %452 = vmatprep.subr.mxu0 0.0
    %453 = vmatpush2.msra.mxu0 %v129
    %454 = vmatprep.subr.mxu0 0.0
    %455 = vmatpush2.msra.mxu0 %v128
    %456 = vmatprep.subr.mxu0 0.0
    %457 = vmatpush2.msra.mxu0 %v127
    %458 = vmatprep.subr.mxu0 0.0
    %459 = vmatpush2.msra.mxu0 %v126
    %460 = vmatprep.mubr.f32.mxu0 %v177
    %461 = vmatmul.mubr.f32.gmra.mxu0 %v175
    %v462 = vpop.f32.mrf.mxu0
    %v463 = vadd.f32 %v393, %v462
    %v464 = vpop.f32.mrf.mxu0
    %465 = vdwg.mxu0
    %vm466 = vcmask 254976
    %v467 = vsel %vm466, %v463, -inf
    %468 = vmax.xlane.f32.xlu0 %v467
    %v469 = vpop.xlane.xlu0 %468
    %v470 = vsub.f32 %v463, %v469
    %v471 = vmul.f32 %v470, 1.442695
    %v472 = vpow.pop %v471
    %v473 = vsel %vm466, %v472, 0.0
    %474 = vadd.xlane.f32.xlu0 %v473
    %v475 = vpop.xlane.xlu0 %474
    %v476 = vrcp.pop %v475
    %v477 = vmul.f32 %v472, %v476
    %478 = vst.msk [vmem:[#allocation2] sm:$0x3] %vm466, %v477
    // Predicated region
    $region10: #{tpu_custom_call.1} parent=1 // pred_check
      _
    $region11: #{tpu_custom_call.1} parent=1 // pred_check_branch
      %480 = sbr.rel (0) target = $region13
    $region12: #{tpu_custom_call.1} parent=1 // pred_region
      %s482 = ssub.s32 32, 32
      %483 = vsyncadd [#allocation3], %s482
      %s485 = sshll.u32 [#allocation2], 4
      %s486 = int_to_ptr.vmem [resolvable:$true] %s485
      %488 = dma.vmem_to_hbm [thread:$0]  %s486, 32, %s2, [#allocation3]
    $region13: #{tpu_custom_call.1} parent=1 // pred_fallthru
      _
    // Predicated region
    $region14: #{tpu_custom_call.1} parent=1 // pred_check
      _
    $region15: #{tpu_custom_call.1} parent=1 // pred_check_branch
      %490 = sbr.rel (0) target = $region17
    $region16: #{tpu_custom_call.1} parent=1 // pred_region
      %491 = dma.done [#allocation3], 32
    $region17: #{tpu_custom_call.1} parent=1 // pred_fallthru
      _
    %492 = vsyncpa [#allocation3], 1

</llo_original>
